<compile_context>
chip_gen: v7x
topology: tpu7x:2x2x1
jax: 0.10.0
libtpu: 0.0.40
codegen_flags: <defaults>
</compile_context>

<pallas_src>
import jax
import jax.numpy as jnp
from jax.experimental import pallas as pl
from jax.experimental.pallas import tpu as pltpu


# -----------------------------------------------------------------------------
# Fused re-parameterised 1-D conv:  y[n, :, t] = W2d @ im2col(x)[n, :, t] + b
# -----------------------------------------------------------------------------
def rep_conv1d_norm_fused(x, w_eff, b_eff, *, padding, l_tile=512):
    """y = conv1d(x, w_eff, SAME padding, stride=1) + b_eff, NCL layout, f32.

    x:      (N, C_in, L)
    w_eff:  (C_out, C_in, K)  fused (conv * BN-scale) weights
    b_eff:  (C_out,)          fused BN bias
    """
    n, c_in, length = x.shape
    c_out, _, k = w_eff.shape
    halo = 128  # one lane-tile of neighbor context per side

    # TODO(synk): padding=0, stride>1, groups>1, ragged last tile (L % l_tile != 0)
    # and training-mode BatchNorm paths of RepConv1dNorm are not implemented.
    assert padding == (k - 1) // 2, "only the SAME-padding path is fused"
    assert padding <= halo
    assert l_tile % 128 == 0
    l_out = length  # SAME padding, stride 1
    assert l_out % l_tile == 0, "l_out must be a multiple of l_tile"
    num_lt = l_out // l_tile
    r = l_tile // halo                 # 128-lane blocks per main tile
    total_halo_blocks = length // halo

    # One im2col weight: column (dk*C_in + ci) <- w_eff[:, ci, dk].
    w2d = jnp.transpose(w_eff, (0, 2, 1)).reshape(c_out, k * c_in)
    b_col = b_eff.reshape(c_out, 1).astype(jnp.float32)

    def kernel(x_cur_ref, x_left_ref, x_right_ref, w_ref, b_ref, o_ref):
        """One (batch, L-tile) step.

        x_cur_ref:   (1, C_in, l_tile)  aligned main chunk
        x_left_ref:  (1, C_in, 128)     previous 128-lane block (garbage at lt==0)
        x_right_ref: (1, C_in, 128)     next 128-lane block (garbage at lt==last)
        w_ref:       (C_out, K*C_in)    im2col weights
        b_ref:       (C_out, 1)         fused bias
        o_ref:       (1, C_out, l_tile) lane-dense output tile
        """
        lt = pl.program_id(1)
        nlt = pl.num_programs(1)

        cur = x_cur_ref[0]                                       # (C_in, LT)
        # Zero the halos at the sequence boundaries -> SAME zero padding,
        # no host-side pad copy needed.
        left = x_left_ref[0] * (lt > 0).astype(cur.dtype)        # (C_in, 128)
        right = x_right_ref[0] * (lt + 1 < nlt).astype(cur.dtype)

        # Lane-aligned concat (128 | LT | 128); only static slicing below.
        window = jnp.concatenate([left, cur, right], axis=-1)    # (C_in, LT+256)
        start = halo - padding
        taps = [window[:, start + dk:start + dk + l_tile] for dk in range(k)]
        rhs = jnp.concatenate(taps, axis=0) if k > 1 else taps[0]  # (K*C_in, LT)

        # Single MXU contraction per tile (instead of K tiny dots).
        acc = jnp.dot(w_ref[...], rhs, preferred_element_type=jnp.float32)
        o_ref[0] = (acc + b_ref[...]).astype(o_ref.dtype)

    flops = 2 * n * c_out * c_in * k * l_out
    bytes_accessed = 4 * (
        x.size                              # each input element read once
        + 2 * n * num_lt * c_in * halo      # small halo re-reads
        + w2d.size + b_col.size
        + n * c_out * l_out)                # output write

    return pl.pallas_call(
        kernel,
        out_shape=jax.ShapeDtypeStruct((n, c_out, l_out), x.dtype),
        grid_spec=pltpu.PrefetchScalarGridSpec(
            num_scalar_prefetch=0,
            grid=(n, num_lt),
            in_specs=[
                # main tile
                pl.BlockSpec((1, c_in, l_tile), lambda b, lt: (b, 0, lt)),
                # previous 128-lane block (clamped at 0; masked in-kernel)
                pl.BlockSpec((1, c_in, halo),
                             lambda b, lt: (b, 0, jnp.maximum(lt * r - 1, 0))),
                # next 128-lane block (clamped at end; masked in-kernel)
                pl.BlockSpec((1, c_in, halo),
                             lambda b, lt: (b, 0, jnp.minimum((lt + 1) * r,
                                                              total_halo_blocks - 1))),
                # weights / bias: constant blocks, fetched once by the pipeline
                pl.BlockSpec((c_out, k * c_in), lambda b, lt: (0, 0)),
                pl.BlockSpec((c_out, 1), lambda b, lt: (0, 0)),
            ],
            out_specs=pl.BlockSpec((1, c_out, l_tile), lambda b, lt: (b, 0, lt)),
        ),
        compiler_params=pltpu.CompilerParams(
            dimension_semantics=("parallel", "parallel"),
        ),
        cost_estimate=pl.CostEstimate(
            flops=int(flops), transcendentals=0, bytes_accessed=int(bytes_accessed)),
    )(x, x, x, w2d, b_col)


# -----------------------------------------------------------------------------
# Host-side re-parameterisation (tiny tensors): RepConv1dNorm.switch_to_deploy()
# -----------------------------------------------------------------------------
def _fuse_conv_bn(w, gamma, beta, mean, var, eps):
    """Fold eval-mode BatchNorm1d into the preceding bias-free conv."""
    t = gamma / jnp.sqrt(var + eps)                     # (C_out,)
    return w * t[:, None, None], beta - mean * t


def fuse_rep_params(kernel_size, main_params, rep_branches, eps, rep_alpha=None):
    """Fold main + residual branches into one K-tap weight and bias."""
    w, b = _fuse_conv_bn(*main_params, eps)
    for idx, (k, params) in enumerate(rep_branches):
        wk, bk = _fuse_conv_bn(*params, eps)
        alpha = 1.0 if rep_alpha is None else rep_alpha[idx]
        ksz = wk.shape[-1]
        if k != 0 and k % 2 == 0:                       # even-k branch: asymmetric pad
            up = (kernel_size - k) // 2
            dn = up + 1
        else:                                           # odd k, or k == 0 (1x1 conv)
            up = dn = (kernel_size - ksz) // 2
        w = w + alpha * jnp.pad(wk, ((0, 0), (0, 0), (up, dn)))
        b = b + alpha * bk
    return w, b


# -----------------------------------------------------------------------------
# Pure-JAX references (exact f32, elementwise only -> no TPU matmul precision issue)
# -----------------------------------------------------------------------------
def _conv1d_exact(x, w, padding):
    """Exact f32 cross-correlation with PyTorch Conv1d semantics."""
    n, c_in, length = x.shape
    c_out, _, k = w.shape
    xp = jnp.pad(x, ((0, 0), (0, 0), (padding, padding)))
    l_out = length + 2 * padding - k + 1
    out = jnp.zeros((n, c_out, l_out), jnp.float32)
    for dk in range(k):
        xs = xp[:, :, dk:dk + l_out]                    # (N, C_in, L_out)
        out = out + jnp.sum(w[None, :, :, dk, None] * xs[:, None, :, :], axis=2)
    return out


def _bn_eval(y, gamma, beta, mean, var, eps):
    t = gamma / jnp.sqrt(var + eps)
    return y * t[None, :, None] + (beta - mean * t)[None, :, None]


def repconv1d_norm_reference(x, padding, main_params, rep_branches, eps):
    """Branch-wise RepConv1dNorm.forward (SAME padding path, eval-mode BN)."""
    w, g, b, mu, v = main_params
    out = _bn_eval(_conv1d_exact(x, w, padding), g, b, mu, v, eps)
    for _, (wk, gk, bk, muk, vk) in rep_branches:
        ksz = wk.shape[-1]
        yk = _conv1d_exact(x, wk, (ksz - 1) // 2)       # odd-k / k==0 branch on full input
        out = out + _bn_eval(yk, gk, bk, muk, vk, eps)
    return out


def _bf16_round(a):
    # Round to bf16-representable f32 so the kernel check is insensitive to whether
    # the MXU evaluates the f32 matmul via bf16 passes.
    return a.astype(jnp.bfloat16).astype(jnp.float32)


if __name__ == "__main__":
    N, C_IN, C_OUT, K, L = 2, 4, 8, 3, 2048
    L_TILE = 512                    # sweepable 512..2048; grid = (2, 4) here
    PADDING = (K - 1) // 2          # "SAME" padding branch of RepConv1dNorm
    EPS = 1e-5
    # module defaults: stride=1, groups=1, bias=False, rep_list=1 -> one k=1 branch

    key = jax.random.PRNGKey(0)
    ks = jax.random.split(key, 11)
    cmax = K ** -0.5
    w_main = jax.random.uniform(ks[0], (C_OUT, C_IN, K), jnp.float32, -cmax, cmax)
    g_main = 1.0 + 0.1 * jax.random.normal(ks[1], (C_OUT,), jnp.float32)
    beta_main = 0.1 * jax.random.normal(ks[2], (C_OUT,), jnp.float32)
    mu_main = 0.1 * jax.random.normal(ks[3], (C_OUT,), jnp.float32)
    var_main = jax.random.uniform(ks[4], (C_OUT,), jnp.float32, 0.5, 1.5)

    w_rep = jax.random.uniform(ks[5], (C_OUT, C_IN, 1), jnp.float32, -1.0, 1.0)
    g_rep = 1.0 + 0.1 * jax.random.normal(ks[6], (C_OUT,), jnp.float32)
    beta_rep = 0.1 * jax.random.normal(ks[7], (C_OUT,), jnp.float32)
    mu_rep = 0.1 * jax.random.normal(ks[8], (C_OUT,), jnp.float32)
    var_rep = jax.random.uniform(ks[9], (C_OUT,), jnp.float32, 0.5, 1.5)

    x = jax.random.normal(ks[10], (N, C_IN, L), jnp.float32)

    main_params = (w_main, g_main, beta_main, mu_main, var_main)
    rep_branches = [(1, (w_rep, g_rep, beta_rep, mu_rep, var_rep))]

    # Fold every branch into one K-tap conv (same algebra as switch_to_deploy()).
    w_eff, b_eff = fuse_rep_params(K, main_params, rep_branches, EPS)

    # Check 1: fused-conv algebra == branch-wise RepConv1dNorm forward (eval BN).
    y_branch = repconv1d_norm_reference(x, PADDING, main_params, rep_branches, EPS)
    y_fused = _conv1d_exact(x, w_eff, PADDING) + b_eff[None, :, None]
    assert jnp.allclose(y_branch, y_fused, rtol=1e-4, atol=1e-4)

    # Check 2: Pallas kernel == exact fused conv (on bf16-representable data).
    xq, wq = _bf16_round(x), _bf16_round(w_eff)
    y = rep_conv1d_norm_fused(xq, wq, b_eff, padding=PADDING, l_tile=L_TILE)
    jax.block_until_ready(y)

    y_ref = _conv1d_exact(xq, wq, PADDING) + b_eff[None, :, None]
    assert y.shape == (N, C_OUT, L), y.shape
    assert jnp.allclose(y, y_ref, rtol=1e-4, atol=1e-4)

    print("KERNEL_OK")
</pallas_src>

<mosaic_0001>
module attributes {stable_mosaic.version = 11 : i64} {
  func.func @kernel(%arg0: i32, %arg1: i32, %arg2: memref<1x4x512xf32, #tpu.memory_space<vmem>>, %arg3: memref<1x4x128xf32, #tpu.memory_space<vmem>>, %arg4: memref<1x4x128xf32, #tpu.memory_space<vmem>>, %arg5: memref<8x12xf32, #tpu.memory_space<vmem>>, %arg6: memref<8x1xf32, #tpu.memory_space<vmem>>, %arg7: memref<1x8x512xf32, #tpu.memory_space<vmem>>) attributes {dimension_semantics = [#tpu.dimension_semantics<parallel>, #tpu.dimension_semantics<parallel>], iteration_bounds = array<i64: 2, 4>, scalar_prefetch = 0 : i64, scratch_operands = 0 : i64, tpu.core_type = #tpu.core_type<tc>, window_params = [{transform_indices = @transform_0, window_bounds = array<i64: 1, 4, 512>}, {transform_indices = @transform_1, window_bounds = array<i64: 1, 4, 128>}, {transform_indices = @transform_2, window_bounds = array<i64: 1, 4, 128>}, {pipeline_mode = #tpu.pipeline_mode<synchronous>, transform_indices = @transform_3, window_bounds = array<i64: 8, 12>}, {pipeline_mode = #tpu.pipeline_mode<synchronous>, transform_indices = @transform_4, window_bounds = array<i64: 8, 1>}, {transform_indices = @transform_5, window_bounds = array<i64: 1, 8, 512>}]} {
    %c0 = arith.constant 0 : index
    %c0_0 = arith.constant 0 : index
    %c0_1 = arith.constant 0 : index
    %0 = vector.load %arg2[%c0, %c0_0, %c0_1] : memref<1x4x512xf32, #tpu.memory_space<vmem>>, vector<1x4x512xf32>
    %1 = vector.shape_cast %0 : vector<1x4x512xf32> to vector<4x512xf32>
    %c0_2 = arith.constant 0 : index
    %c0_3 = arith.constant 0 : index
    %c0_4 = arith.constant 0 : index
    %2 = vector.load %arg3[%c0_2, %c0_3, %c0_4] : memref<1x4x128xf32, #tpu.memory_space<vmem>>, vector<1x4x128xf32>
    %3 = vector.shape_cast %2 : vector<1x4x128xf32> to vector<4x128xf32>
    %c0_i32 = arith.constant 0 : i32
    %4 = arith.cmpi sgt, %arg1, %c0_i32 : i32
    %5 = arith.extui %4 : i1 to i32
    %6 = arith.sitofp %5 : i32 to f32
    %7 = vector.broadcast %6 : f32 to vector<4x128xf32>
    %8 = arith.mulf %3, %7 : vector<4x128xf32>
    %c0_5 = arith.constant 0 : index
    %c0_6 = arith.constant 0 : index
    %c0_7 = arith.constant 0 : index
    %9 = vector.load %arg4[%c0_5, %c0_6, %c0_7] : memref<1x4x128xf32, #tpu.memory_space<vmem>>, vector<1x4x128xf32>
    %10 = vector.shape_cast %9 : vector<1x4x128xf32> to vector<4x128xf32>
    %c1_i32 = arith.constant 1 : i32
    %11 = arith.addi %arg1, %c1_i32 : i32
    %c4_i32 = arith.constant 4 : i32
    %12 = arith.cmpi slt, %11, %c4_i32 : i32
    %13 = arith.extui %12 : i1 to i32
    %14 = arith.sitofp %13 : i32 to f32
    %15 = vector.broadcast %14 : f32 to vector<4x128xf32>
    %16 = arith.mulf %10, %15 : vector<4x128xf32>
    %17 = tpu.concatenate %8, %1, %16 in 1 : vector<4x128xf32>, vector<4x512xf32>, vector<4x128xf32> -> vector<4x768xf32>
    %18 = vector.extract_strided_slice %17 {offsets = [0, 127], sizes = [4, 512], strides = [1, 1]} : vector<4x768xf32> to vector<4x512xf32>
    %19 = vector.extract_strided_slice %17 {offsets = [0, 128], sizes = [4, 512], strides = [1, 1]} : vector<4x768xf32> to vector<4x512xf32>
    %20 = vector.extract_strided_slice %17 {offsets = [0, 129], sizes = [4, 512], strides = [1, 1]} : vector<4x768xf32> to vector<4x512xf32>
    %21 = tpu.concatenate %18, %19, %20 in 0 : vector<4x512xf32>, vector<4x512xf32>, vector<4x512xf32> -> vector<12x512xf32>
    %c0_8 = arith.constant 0 : index
    %c0_9 = arith.constant 0 : index
    %22 = vector.load %arg5[%c0_8, %c0_9] : memref<8x12xf32, #tpu.memory_space<vmem>>, vector<8x12xf32>
    %cst = arith.constant dense<0.000000e+00> : vector<8x512xf32>
    %23 = tpu.matmul %22, %21, %cst {dimension_numbers = #tpu.dot_dimension_numbers<[1], [0], [0], [1], [0, 0, 1, 1], [], []>} : vector<8x12xf32>, vector<12x512xf32>, vector<8x512xf32> -> vector<8x512xf32>
    %c0_10 = arith.constant 0 : index
    %c0_11 = arith.constant 0 : index
    %24 = vector.load %arg6[%c0_10, %c0_11] : memref<8x1xf32, #tpu.memory_space<vmem>>, vector<8x1xf32>
    %25 = vector.broadcast %24 : vector<8x1xf32> to vector<8x512xf32>
    %26 = arith.addf %23, %25 : vector<8x512xf32>
    %c0_12 = arith.constant 0 : index
    %c0_13 = arith.constant 0 : index
    %c0_14 = arith.constant 0 : index
    %27 = vector.load %arg7[%c0_12, %c0_13, %c0_14] : memref<1x8x512xf32, #tpu.memory_space<vmem>>, vector<1x8x512xf32>
    %28 = vector.shape_cast %27 : vector<1x8x512xf32> to vector<8x512xf32>
    %29 = vector.shape_cast %26 : vector<8x512xf32> to vector<1x8x512xf32>
    tpu.vector_store %arg7[%c0_12, %c0_13, %c0_14], %29 {strides = array<i32>} : memref<1x8x512xf32, #tpu.memory_space<vmem>>, vector<1x8x512xf32>,
    return
  }
  func.func @transform_0(%arg0: i32, %arg1: i32) -> (i32, i32, i32) {
    %c0_i32 = arith.constant 0 : i32
    %c0_i32_0 = arith.constant 0 : i32
    return %arg0, %c0_i32, %arg1 : i32, i32, i32
  }
  func.func @transform_1(%arg0: i32, %arg1: i32) -> (i32, i32, i32) {
    %c4_i32 = arith.constant 4 : i32
    %0 = arith.muli %arg1, %c4_i32 : i32
    %c1_i32 = arith.constant 1 : i32
    %1 = arith.subi %0, %c1_i32 : i32
    %c0_i32 = arith.constant 0 : i32
    %2 = arith.maxsi %1, %c0_i32 : i32
    %c0_i32_0 = arith.constant 0 : i32
    %c0_i32_1 = arith.constant 0 : i32
    return %arg0, %c0_i32_0, %2 : i32, i32, i32
  }
  func.func @transform_2(%arg0: i32, %arg1: i32) -> (i32, i32, i32) {
    %c1_i32 = arith.constant 1 : i32
    %0 = arith.addi %arg1, %c1_i32 : i32
    %c4_i32 = arith.constant 4 : i32
    %1 = arith.muli %0, %c4_i32 : i32
    %c15_i32 = arith.constant 15 : i32
    %2 = arith.minsi %1, %c15_i32 : i32
    %c0_i32 = arith.constant 0 : i32
    %c0_i32_0 = arith.constant 0 : i32
    return %arg0, %c0_i32, %2 : i32, i32, i32
  }
  func.func @transform_3(%arg0: i32, %arg1: i32) -> (i32, i32) {
    %c0_i32 = arith.constant 0 : i32
    %c0_i32_0 = arith.constant 0 : i32
    %c0_i32_1 = arith.constant 0 : i32
    return %c0_i32, %c0_i32_0 : i32, i32
  }
  func.func @transform_4(%arg0: i32, %arg1: i32) -> (i32, i32) {
    %c0_i32 = arith.constant 0 : i32
    %c0_i32_0 = arith.constant 0 : i32
    %c0_i32_1 = arith.constant 0 : i32
    return %c0_i32, %c0_i32_0 : i32, i32
  }
  func.func @transform_5(%arg0: i32, %arg1: i32) -> (i32, i32, i32) {
    %c0_i32 = arith.constant 0 : i32
    %c0_i32_0 = arith.constant 0 : i32
    return %arg0, %c0_i32, %arg1 : i32, i32, i32
  }
}

</mosaic_0001>

<llo_original>
// kernel: tpu_custom_call.1
$region0: #{tpu_custom_call.1}
  #allocation0 [shape = 'u32[]', space=smem, size = 0x4, offset = 0x4, fixed_abs, tag = 'smem constant byte address 0x4 - core index']
  #allocation1 [shape = 'u32[144,128]{1,0:T(1,128)}', space=vmem, size = 0x12000, scoped, tag = 'internal scratch']
  %s0 = inlined_call_operand.hbm [shape: f32[2,4,2048], index: 0, kind: input, shape index: {}]
  %s1 = inlined_call_operand.hbm [shape: f32[2,4,2048], index: 1, kind: input, shape index: {}]
  %s2 = inlined_call_operand.hbm [shape: f32[2,4,2048], index: 2, kind: input, shape index: {}]
  %s3 = inlined_call_operand.vmem [shape: f32[8,12], index: 3, kind: input, shape index: {}]
  %s4 = inlined_call_operand.vmem [shape: f32[8,1], index: 4, kind: input, shape index: {}]
  %s5 = inlined_call_operand.hbm [shape: f32[2,8,2048], index: 5, kind: output, shape index: {}]
  %s6 = sld [smem:[#allocation0]]
  $region65: #{tpu_custom_call.1} parent=0
    _
  %s8 = ssub.s32 1, %s6
  %s9 = scalar_select 0, %s8, %s6
  $region1: #{tpu_custom_call.1} parent=0
    #allocation2 [shape = 'u8[16384]{0}', space=vmem, size = 0x4000, scoped, tag = 'input window, operand 0']
    #allocation3 [shape = 's32[2]{0}', space=sflag, size = 0x8, scoped, tag = 'scoped memory for tpu_custom_call.1']
    #allocation4 [shape = 's32[2]{0}', space=sflag, size = 0x8, scoped, tag = 'scoped memory for tpu_custom_call.1']
    #allocation5 [shape = 'u8[4096]{0}', space=vmem, size = 0x1000, scoped, tag = 'input window, operand 1']
    #allocation6 [shape = 's32[2]{0}', space=sflag, size = 0x8, scoped, tag = 'scoped memory for tpu_custom_call.1']
    #allocation7 [shape = 'u8[4096]{0}', space=vmem, size = 0x1000, scoped, tag = 'input window, operand 2']
    #allocation8 [shape = 'u8[32768]{0}', space=vmem, size = 0x8000, scoped, tag = 'output window, operand 0']
    %10 = vsyncpa [#allocation3], 0
    %s11 = scalar_lea.sflag [#allocation3], 1
    %12 = vsyncpa %s11, 0
    %13 = vsyncpa [#allocation6], 0
    %s14 = scalar_lea.sflag [#allocation6], 1
    %15 = vsyncpa %s14, 0
    %16 = vsyncpa [#allocation4], 0
    %s17 = scalar_lea.sflag [#allocation4], 1
    %18 = vsyncpa %s17, 0
    loop: start=0, step=1, limit=10
    $region2: #{tpu_custom_call.1} parent=1 // loop_pre_header
      _
    $region3: #{tpu_custom_call.1} parent=1 // loop_header
      %s20 = sphi 0, %s24
      %p21 = scmp.ge.s32.totalorder %s20, 10
      %s27 = sphi 0, %s39
      %s28 = sphi 0, %s35
      %s29 = sphi 0, %s27
      %s30 = sphi 0, %s28
      %s31 = sphi 0, %s29
      %s32 = sphi 0, %s30
      %s44 = sphi 0, %s46
      %s47 = sphi 0, %s44
      %s48 = sphi 0, %s47
      %s64 = sphi 0, %s48
      %s80 = sphi 0, %s82
      %s83 = sphi 0, %s80
      %s84 = sphi 0, %s83
      %s100 = sphi 0, %s84
      %s116 = sphi 0, %s118
      %s119 = sphi 0, %s116
      %s120 = sphi 0, %s119
      %s136 = sphi 0, %s120
      %s140 = sphi 0, %s140
      %s142 = sphi 0, %s140
      %s143 = sphi 0, %s142
      %s157 = sphi 0, %s143
      %s161 = sphi 0, %s161
      %s163 = sphi 0, %s161
      %s164 = sphi 0, %s163
      %s178 = sphi 0, %s164
      %s186 = sphi 0, %s188
      %s189 = sphi 0, %s186
      %s190 = sphi 0, %s189
      %s206 = sphi 0, %s190
    $region4: #{tpu_custom_call.1} parent=1 // loop_header_branch
      %23 = sbr.rel (%p21) target = $region8
    $region5: #{tpu_custom_call.1} parent=1 // loop_body
      %s25 = ssub.s32 %s20, 1
      %s26 = ssub.s32 %s20, 2
      %s33 = sadd.s32 1, %s28
      %p34 = scmp.ge.s32.totalorder %s33, 4
      %s35 = scalar_select %p34, 0, %s33
      %s36 = sadd.s32 1, %s27
      %s37 = scalar_select %p34, %s36, %s27
      %p38 = scmp.ge.s32.totalorder %s37, 2
      %s39 = scalar_select %p38, 0, %s37
      %s40 = ssub.s32 %s27, %s39
      %s41 = ssub.s32 %s28, %s35
      %s42 = sor.u32 %s40, %s41
      %p43 = scmp.eq.s32.totalorder %s42, 0
      %s45 = sadd.s32 %s44, 1
      %s46 = scalar_select %p43, %s44, %s45
      %p49 = pneg %p43
      %p50 = scmp.eq.s32.totalorder %s20, 7
      %p51 = por %p49, %p50
      %p52 = scmp.ne.s32.totalorder %s44, %s47
      %p53 = scmp.eq.s32.totalorder %s20, 0
      %p54 = por %p52, %p53
      %p55 = scmp.ne.s32.totalorder %s44, %s47
      %p56 = scmp.eq.s32.totalorder %s25, 7
      %p57 = por %p55, %p56
      %p58 = scmp.ne.s32.totalorder %s47, %s48
      %p59 = scmp.eq.s32.totalorder %s25, 0
      %p60 = por %p58, %p59
      %p61 = scmp.ne.s32.totalorder %s47, %s48
      %p62 = scmp.eq.s32.totalorder %s26, 7
      %p63 = por %p61, %p62
      %p65 = scmp.ne.s32.totalorder %s48, %s64
      %p66 = scmp.eq.s32.totalorder %s26, 0
      %p67 = por %p65, %p66
      %s68 = smul.u32 %s28, 4
      %s69 = ssub.s32 %s68, 1
      %p70 = scmp.gt.s32.totalorder %s69, 0
      %s71 = scalar_select %p70, %s69, 0
      %s72 = smul.u32 %s35, 4
      %s73 = ssub.s32 %s72, 1
      %p74 = scmp.gt.s32.totalorder %s73, 0
      %s75 = scalar_select %p74, %s73, 0
      %s76 = ssub.s32 %s27, %s39
      %s77 = ssub.s32 %s71, %s75
      %s78 = sor.u32 %s76, %s77
      %p79 = scmp.eq.s32.totalorder %s78, 0
      %s81 = sadd.s32 %s80, 1
      %s82 = scalar_select %p79, %s80, %s81
      %p85 = pneg %p79
      %p86 = scmp.eq.s32.totalorder %s20, 7
      %p87 = por %p85, %p86
      %p88 = scmp.ne.s32.totalorder %s80, %s83
      %p89 = scmp.eq.s32.totalorder %s20, 0
      %p90 = por %p88, %p89
      %p91 = scmp.ne.s32.totalorder %s80, %s83
      %p92 = scmp.eq.s32.totalorder %s25, 7
      %p93 = por %p91, %p92
      %p94 = scmp.ne.s32.totalorder %s83, %s84
      %p95 = scmp.eq.s32.totalorder %s25, 0
      %p96 = por %p94, %p95
      %p97 = scmp.ne.s32.totalorder %s83, %s84
      %p98 = scmp.eq.s32.totalorder %s26, 7
      %p99 = por %p97, %p98
      %p101 = scmp.ne.s32.totalorder %s84, %s100
      %p102 = scmp.eq.s32.totalorder %s26, 0
      %p103 = por %p101, %p102
      %s104 = sadd.s32 %s28, 1
      %s105 = smul.u32 %s104, 4
      %p106 = scmp.lt.s32.totalorder %s105, 15
      %s107 = scalar_select %p106, %s105, 15
      %s108 = sadd.s32 %s35, 1
      %s109 = smul.u32 %s108, 4
      %p110 = scmp.lt.s32.totalorder %s109, 15
      %s111 = scalar_select %p110, %s109, 15
      %s112 = ssub.s32 %s27, %s39
      %s113 = ssub.s32 %s107, %s111
      %s114 = sor.u32 %s112, %s113
      %p115 = scmp.eq.s32.totalorder %s114, 0
      %s117 = sadd.s32 %s116, 1
      %s118 = scalar_select %p115, %s116, %s117
      %p121 = pneg %p115
      %p122 = scmp.eq.s32.totalorder %s20, 7
      %p123 = por %p121, %p122
      %p124 = scmp.ne.s32.totalorder %s116, %s119
      %p125 = scmp.eq.s32.totalorder %s20, 0
      %p126 = por %p124, %p125
      %p127 = scmp.ne.s32.totalorder %s116, %s119
      %p128 = scmp.eq.s32.totalorder %s25, 7
      %p129 = por %p127, %p128
      %p130 = scmp.ne.s32.totalorder %s119, %s120
      %p131 = scmp.eq.s32.totalorder %s25, 0
      %p132 = por %p130, %p131
      %p133 = scmp.ne.s32.totalorder %s119, %s120
      %p134 = scmp.eq.s32.totalorder %s26, 7
      %p135 = por %p133, %p134
      %p137 = scmp.ne.s32.totalorder %s120, %s136
      %p138 = scmp.eq.s32.totalorder %s26, 0
      %p139 = por %p137, %p138
      %s141 = sadd.s32 %s140, 1
      %p144 = scmp.eq.s32.totalorder %s20, 7
      %p145 = scmp.ne.s32.totalorder %s140, %s142
      %p146 = scmp.eq.s32.totalorder %s20, 0
      %p147 = por %p145, %p146
      %p148 = scmp.ne.s32.totalorder %s140, %s142
      %p149 = scmp.eq.s32.totalorder %s25, 7
      %p150 = por %p148, %p149
      %p151 = scmp.ne.s32.totalorder %s142, %s143
      %p152 = scmp.eq.s32.totalorder %s25, 0
      %p153 = por %p151, %p152
      %p154 = scmp.ne.s32.totalorder %s142, %s143
      %p155 = scmp.eq.s32.totalorder %s26, 7
      %p156 = por %p154, %p155
      %p158 = scmp.ne.s32.totalorder %s143, %s157
      %p159 = scmp.eq.s32.totalorder %s26, 0
      %p160 = por %p158, %p159
      %s162 = sadd.s32 %s161, 1
      %p165 = scmp.eq.s32.totalorder %s20, 7
      %p166 = scmp.ne.s32.totalorder %s161, %s163
      %p167 = scmp.eq.s32.totalorder %s20, 0
      %p168 = por %p166, %p167
      %p169 = scmp.ne.s32.totalorder %s161, %s163
      %p170 = scmp.eq.s32.totalorder %s25, 7
      %p171 = por %p169, %p170
      %p172 = scmp.ne.s32.totalorder %s163, %s164
      %p173 = scmp.eq.s32.totalorder %s25, 0
      %p174 = por %p172, %p173
      %p175 = scmp.ne.s32.totalorder %s163, %s164
      %p176 = scmp.eq.s32.totalorder %s26, 7
      %p177 = por %p175, %p176
      %p179 = scmp.ne.s32.totalorder %s164, %s178
      %p180 = scmp.eq.s32.totalorder %s26, 0
      %p181 = por %p179, %p180
      %s182 = ssub.s32 %s27, %s39
      %s183 = ssub.s32 %s28, %s35
      %s184 = sor.u32 %s182, %s183
      %p185 = scmp.eq.s32.totalorder %s184, 0
      %s187 = sadd.s32 %s186, 1
      %s188 = scalar_select %p185, %s186, %s187
      %p191 = pneg %p185
      %p192 = scmp.eq.s32.totalorder %s20, 7
      %p193 = por %p191, %p192
      %p194 = scmp.ne.s32.totalorder %s186, %s189
      %p195 = scmp.eq.s32.totalorder %s20, 0
      %p196 = por %p194, %p195
      %p197 = scmp.ne.s32.totalorder %s186, %s189
      %p198 = scmp.eq.s32.totalorder %s25, 7
      %p199 = por %p197, %p198
      %p200 = scmp.ne.s32.totalorder %s189, %s190
      %p201 = scmp.eq.s32.totalorder %s25, 0
      %p202 = por %p200, %p201
      %p203 = scmp.ne.s32.totalorder %s189, %s190
      %p204 = scmp.eq.s32.totalorder %s26, 7
      %p205 = por %p203, %p204
      %p207 = scmp.ne.s32.totalorder %s190, %s206
      %p208 = scmp.eq.s32.totalorder %s26, 0
      %p209 = por %p207, %p208
      %p210 = scmp.le.s32.totalorder 1, %s20
      %p211 = scmp.lt.s32.totalorder %s20, 9
      %p212 = pnand %p210, %p211
      %p213 = pneg %p212
      // Predicated region
      $region9: #{tpu_custom_call.1} parent=5 // pred_check
        _
      $region10: #{tpu_custom_call.1} parent=5 // pred_check_branch
        %215 = sbr.rel (%p212) target = $region12
      $region11: #{tpu_custom_call.1} parent=5 // pred_region
        %s216 = ssub.s32 %s20, 1
        // Predicated region
        $region13: #{tpu_custom_call.1} parent=11 // pred_check
          %p217 = pneg %p153
        $region14: #{tpu_custom_call.1} parent=11 // pred_check_branch
          %219 = sbr.rel (%p217) target = $region16
        $region15: #{tpu_custom_call.1} parent=11 // pred_region
          _
        $region16: #{tpu_custom_call.1} parent=11 // pred_fallthru
          _
        // Predicated region
        $region17: #{tpu_custom_call.1} parent=11 // pred_check
          %p220 = pneg %p174
        $region18: #{tpu_custom_call.1} parent=11 // pred_check_branch
          %222 = sbr.rel (%p220) target = $region20
        $region19: #{tpu_custom_call.1} parent=11 // pred_region
          _
        $region20: #{tpu_custom_call.1} parent=11 // pred_fallthru
          _
      $region12: #{tpu_custom_call.1} parent=5 // pred_fallthru
        _
      %p223 = scmp.lt.s32.totalorder %s20, 8
      // Predicated region
      $region21: #{tpu_custom_call.1} parent=5 // pred_check
        %p224 = pneg %p223
      $region22: #{tpu_custom_call.1} parent=5 // pred_check_branch
        %226 = sbr.rel (%p224) target = $region24
      $region23: #{tpu_custom_call.1} parent=5 // pred_region
        // Predicated region
        $region25: #{tpu_custom_call.1} parent=23 // pred_check
          %p227 = pneg %p54
        $region26: #{tpu_custom_call.1} parent=23 // pred_check_branch
          %229 = sbr.rel (%p227) target = $region28
        $region27: #{tpu_custom_call.1} parent=23 // pred_region
          %s230 = sand.u32 %s44, 1
          %s231 = scalar_lea.sflag [#allocation3], %s230
          %s232 = sand.u32 %s44, 1
          %s233 = smul.addr %s232, 16
          %s234 = scalar_lea.vmem [#allocation2], %s233
          %s235 = smul.u32 4, %s28
          %s237 = ssub.s32 256, 256
          %238 = vsyncadd %s231, %s237
          %s239 = smul.addr %s27, 16
          %s240 = sadd.s32 %s235, %s239
          %s241 = smul.addr %s240, 64
          %s242 = scalar_lea.hbm %s0, %s241
          %s244 = sshll.u32 %s234, 4
          %s245 = int_to_ptr.vmem [resolvable:$true] %s244
          %247 = dma.hbm_to_vmem [thread:$0]  %s242, 256, %s245, %s231
        $region28: #{tpu_custom_call.1} parent=23 // pred_fallthru
          _
        // Predicated region
        $region29: #{tpu_custom_call.1} parent=23 // pred_check
          %p248 = pneg %p90
        $region30: #{tpu_custom_call.1} parent=23 // pred_check_branch
          %250 = sbr.rel (%p248) target = $region32
        $region31: #{tpu_custom_call.1} parent=23 // pred_region
          %s251 = sand.u32 %s20, 1
          %s252 = scalar_lea.sflag [#allocation6], %s251
          %s253 = sand.u32 %s80, 1
          %s254 = smul.addr %s253, 4
          %s255 = scalar_lea.vmem [#allocation5], %s254
          %s256 = smul.u32 %s28, 4
          %s257 = ssub.s32 %s256, 1
          %p258 = scmp.gt.s32.totalorder %s257, 0
          %s259 = scalar_select %p258, %s257, 0
          %s261 = ssub.s32 64, 64
          %262 = vsyncadd %s252, %s261
          %s263 = smul.addr %s27, 16
          %s264 = sadd.s32 %s259, %s263
          %s265 = smul.addr %s264, 64
          %s266 = scalar_lea.hbm %s1, %s265
          %s268 = sshll.u32 %s255, 4
          %s269 = int_to_ptr.vmem [resolvable:$true] %s268
          %271 = dma.hbm_to_vmem [thread:$0]  %s266, 64, %s269, %s252
        $region32: #{tpu_custom_call.1} parent=23 // pred_fallthru
          _
        // Predicated region
        $region33: #{tpu_custom_call.1} parent=23 // pred_check
          %p272 = pneg %p126
        $region34: #{tpu_custom_call.1} parent=23 // pred_check_branch
          %274 = sbr.rel (%p272) target = $region36
        $region35: #{tpu_custom_call.1} parent=23 // pred_region
          %s275 = sand.u32 %s20, 1
          %s276 = scalar_lea.sflag [#allocation6], %s275
          %s277 = sand.u32 %s116, 1
          %s278 = smul.addr %s277, 4
          %s279 = scalar_lea.vmem [#allocation7], %s278
          %s280 = sadd.s32 %s28, 1
          %s281 = smul.u32 %s280, 4
          %p282 = scmp.lt.s32.totalorder %s281, 15
          %s283 = scalar_select %p282, %s281, 15
          %s285 = ssub.s32 64, 64
          %286 = vsyncadd %s276, %s285
          %s287 = smul.addr %s27, 16
          %s288 = sadd.s32 %s283, %s287
          %s289 = smul.addr %s288, 64
          %s290 = scalar_lea.hbm %s2, %s289
          %s292 = sshll.u32 %s279, 4
          %s293 = int_to_ptr.vmem [resolvable:$true] %s292
          %295 = dma.hbm_to_vmem [thread:$0]  %s290, 64, %s293, %s276
        $region36: #{tpu_custom_call.1} parent=23 // pred_fallthru
          _
      $region24: #{tpu_custom_call.1} parent=5 // pred_fallthru
        _
      %p296 = scmp.le.s32.totalorder 1, %s20
      %p297 = scmp.lt.s32.totalorder %s20, 9
      %p298 = pnand %p296, %p297
      %p299 = pneg %p298
      // Predicated region
      $region37: #{tpu_custom_call.1} parent=5 // pred_check
        _
      $region38: #{tpu_custom_call.1} parent=5 // pred_check_branch
        %301 = sbr.rel (%p298) target = $region40
      $region39: #{tpu_custom_call.1} parent=5 // pred_region
        %s302 = ssub.s32 %s20, 1
        %s303 = sand.u32 %s47, 1
        %s304 = scalar_lea.sflag [#allocation3], %s303
        %s305 = sand.u32 %s47, 1
        %s306 = smul.addr %s305, 16
        %s307 = scalar_lea.vmem [#allocation2], %s306
        // Predicated region
        $region41: #{tpu_custom_call.1} parent=39 // pred_check
          %p308 = pneg %p60
        $region42: #{tpu_custom_call.1} parent=39 // pred_check_branch
          %310 = sbr.rel (%p308) target = $region44
        $region43: #{tpu_custom_call.1} parent=39 // pred_region
          %311 = dma.done %s304, 256
        $region44: #{tpu_custom_call.1} parent=39 // pred_fallthru
          _
        %s312 = sand.u32 %s25, 1
        %s313 = scalar_lea.sflag [#allocation6], %s312
        %s314 = sand.u32 %s83, 1
        %s315 = smul.addr %s314, 4
        %s316 = scalar_lea.vmem [#allocation5], %s315
        // Predicated region
        $region45: #{tpu_custom_call.1} parent=39 // pred_check
          %p317 = pneg %p96
        $region46: #{tpu_custom_call.1} parent=39 // pred_check_branch
          %319 = sbr.rel (%p317) target = $region48
        $region47: #{tpu_custom_call.1} parent=39 // pred_region
          %320 = dma.done %s313, 64
        $region48: #{tpu_custom_call.1} parent=39 // pred_fallthru
          _
        %s321 = sand.u32 %s25, 1
        %s322 = scalar_lea.sflag [#allocation6], %s321
        %s323 = sand.u32 %s119, 1
        %s324 = smul.addr %s323, 4
        %s325 = scalar_lea.vmem [#allocation7], %s324
        // Predicated region
        $region49: #{tpu_custom_call.1} parent=39 // pred_check
          %p326 = pneg %p132
        $region50: #{tpu_custom_call.1} parent=39 // pred_check_branch
          %328 = sbr.rel (%p326) target = $region52
        $region51: #{tpu_custom_call.1} parent=39 // pred_region
          %329 = dma.done %s322, 64
        $region52: #{tpu_custom_call.1} parent=39 // pred_fallthru
          _
        %s330 = sand.u32 %s47, 1
        %s331 = scalar_lea.sflag [#allocation3], %s330
        %s332 = sand.u32 %s47, 1
        %s333 = smul.addr %s332, 16
        %s334 = scalar_lea.vmem [#allocation2], %s333
        %p335 = pneg %p60
        %p336 = pneg %p57
        %s337 = sand.u32 %s25, 1
        %s338 = scalar_lea.sflag [#allocation6], %s337
        %s339 = sand.u32 %s83, 1
        %s340 = smul.addr %s339, 4
        %s341 = scalar_lea.vmem [#allocation5], %s340
        %p342 = pneg %p96
        %p343 = pneg %p93
        %s344 = sand.u32 %s25, 1
        %s345 = scalar_lea.sflag [#allocation6], %s344
        %s346 = sand.u32 %s119, 1
        %s347 = smul.addr %s346, 4
        %s348 = scalar_lea.vmem [#allocation7], %s347
        %p349 = pneg %p132
        %p350 = pneg %p129
        %p351 = pneg %p153
        %p352 = pneg %p150
        %p353 = pneg %p174
        %p354 = pneg %p171
        %p355 = pneg %p202
        %p356 = pneg %p199
        %s357 = sand.u32 %s189, 1
        %s358 = scalar_lea.sflag [#allocation4], %s357
        %s359 = sand.u32 %s189, 1
        %s360 = smul.addr %s359, 32
        %s361 = scalar_lea.vmem [#allocation8], %s360
        %s362 = smul.u32 4, %s30
        %s363 = smul.u32 %s30, 4
        %s364 = ssub.s32 %s363, 1
        %p365 = scmp.gt.s32.totalorder %s364, 0
        %s366 = scalar_select %p365, %s364, 0
        %s367 = sadd.s32 %s30, 1
        %s368 = smul.u32 %s367, 4
        %p369 = scmp.lt.s32.totalorder %s368, 15
        %s370 = scalar_select %p369, %s368, 15
        %s371 = smul.u32 4, %s30
        %v372 = vld [vmem:[%s307] sm:$0xff]
        %v373 = vld [vmem:[%s307 + $0x8] sm:$0xff]
        %v374 = vld [vmem:[%s316] sm:$0xf]
        %p375 = scmp.gt.s32.totalorder %s30, 0
        %s376 = scalar_select %p375, 1, 0
        %s377 = scvt.s32.f32 %s376
        %v378 = vstv %s377
        %v379 = vmul.f32 %v374, %v378
        %v380 = vld [vmem:[%s325] sm:$0xf]
        %s381 = sadd.s32 %s30, 1
        %p382 = scmp.lt.s32.totalorder %s381, 4
        %s383 = scalar_select %p382, 1, 0
        %s384 = scvt.s32.f32 %s383
        %v385 = vstv %s384
        %v386 = vmul.f32 %v380, %v385
        %v389 = vcombine.high %v372, %v372
        %v390 = vcombine.high %v373, %v373
        %v393 = vrot.slane %v372, 4
        %v394 = vrot.slane %v389, 4
        %v395 = vrot.slane %v373, 4
        %v396 = vrot.slane %v390, 4
        %397 = vrot.lane.b32.xlu0 %v393, 127
        %v398 = vpop.permute.xlu0 %397
        %399 = vrot.lane.b32.xlu0 %v394, 127
        %v400 = vpop.permute.xlu0 %399
        %401 = vrot.lane.b32.xlu0 %v395, 127
        %v402 = vpop.permute.xlu0 %401
        %403 = vrot.lane.b32.xlu0 %v396, 127
        %v404 = vpop.permute.xlu0 %403
        %vm405 = vcmask 1039360
        %v406 = vsel %vm405, %v398, %v400
        %v407 = vsel %vm405, %v400, %v402
        %v408 = vsel %vm405, %v402, %v404
        %415 = vrot.lane.b32.xlu0 %v372, 126
        %v416 = vpop.permute.xlu0 %415
        %417 = vrot.lane.b32.xlu0 %v389, 126
        %v418 = vpop.permute.xlu0 %417
        %419 = vrot.lane.b32.xlu0 %v373, 126
        %v420 = vpop.permute.xlu0 %419
        %421 = vrot.lane.b32.xlu0 %v390, 126
        %v422 = vpop.permute.xlu0 %421
        %423 = vrot.lane.b32.xlu0 %v386, 126
        %v424 = vpop.permute.xlu0 %423
        %vm425 = vcmask 1031168
        %v426 = vsel %vm425, %v416, %v418
        %v427 = vsel %vm425, %v418, %v420
        %v428 = vsel %vm425, %v420, %v422
        %v429 = vsel %vm425, %v422, %v424
        %vm430 = vcmask 1043456
        %v431 = vsel %vm430, %v379, %v398
        %v432 = vsel %vm430, %v372, %v406
        %v433 = vsel %vm430, %v389, %v407
        %v434 = vsel %vm430, %v373, %v408
        %v435 = vsel %vm430, %v390, %v404
        %v436 = vld [vmem:[%s3] sm:$0xff]
        %v437 = vld [vmem:[%s4] sm:$0xff]
        %439 = vset.pattern.permute.xlu0 0
        %440 = vperm.xlu0 %439, %v437
        %v441 = vpop.permute.xlu0 %440
        %448 = vrot.lane.b32.xlu0 %v431, 1
        %v449 = vpop.permute.xlu0 %448
        %450 = vrot.lane.b32.xlu0 %v432, 1
        %v451 = vpop.permute.xlu0 %450
        %452 = vrot.lane.b32.xlu0 %v433, 1
        %v453 = vpop.permute.xlu0 %452
        %454 = vrot.lane.b32.xlu0 %v434, 1
        %v455 = vpop.permute.xlu0 %454
        %456 = vrot.lane.b32.xlu0 %v435, 1
        %v457 = vpop.permute.xlu0 %456
        %458 = vrot.lane.b32.xlu0 %v416, 1
        %v459 = vpop.permute.xlu0 %458
        %460 = vrot.lane.b32.xlu0 %v426, 1
        %v461 = vpop.permute.xlu0 %460
        %462 = vrot.lane.b32.xlu0 %v427, 1
        %v463 = vpop.permute.xlu0 %462
        %464 = vrot.lane.b32.xlu0 %v428, 1
        %v465 = vpop.permute.xlu0 %464
        %466 = vrot.lane.b32.xlu0 %v429, 1
        %v467 = vpop.permute.xlu0 %466
        %vm468 = vcmask 7168
        %v469 = vsel %vm468, %v449, %v451
        %v470 = vsel %vm468, %v451, %v453
        %v471 = vsel %vm468, %v453, %v455
        %v472 = vsel %vm468, %v455, %v457
        %v473 = vsel %vm468, %v459, %v461
        %v474 = vsel %vm468, %v461, %v463
        %v475 = vsel %vm468, %v463, %v465
        %v476 = vsel %vm468, %v465, %v467
        %vm481 = vcmask 97280
        %v483 = vsel %vm481, %v436, 0
        %v485 = vsel %vm430, %v473, 0
        %v487 = vsel %vm430, %v474, 0
        %v489 = vsel %vm430, %v475, 0
        %v491 = vsel %vm430, %v476, 0
        %493 = vmatprep.subr.mxu0 %v470
        %494 = vmatpush1.msra.mxu0 %v469
        %495 = vmatprep.subr.mxu0 %v487
        %496 = vmatpush1.msra.mxu0 %v485
        %497 = vmatprep.subr.mxu0 0.0
        %498 = vmatpush1.msra.mxu0 0.0
        %499 = vmatprep.subr.mxu0 0.0
        %500 = vmatpush1.msra.mxu0 0.0
        %501 = vmatprep.subr.mxu0 0.0
        %502 = vmatpush1.msra.mxu0 0.0
        %503 = vmatprep.subr.mxu0 0.0
        %504 = vmatpush1.msra.mxu0 0.0
        %505 = vmatprep.subr.mxu0 0.0
        %506 = vmatpush1.msra.mxu0 0.0
        %507 = vmatprep.subr.mxu0 0.0
        %508 = vmatpush1.msra.mxu0 0.0
        %509 = vmatprep.subr.mxu0 0.0
        %510 = vmatpush1.msra.mxu0 0.0
        %511 = vmatprep.subr.mxu0 0.0
        %512 = vmatpush1.msra.mxu0 0.0
        %513 = vmatprep.subr.mxu0 0.0
        %514 = vmatpush1.msra.mxu0 0.0
        %515 = vmatprep.subr.mxu0 0.0
        %516 = vmatpush1.msra.mxu0 0.0
        %517 = vmatprep.subr.mxu0 0.0
        %518 = vmatpush1.msra.mxu0 0.0
        %519 = vmatprep.subr.mxu0 0.0
        %520 = vmatpush1.msra.mxu0 0.0
        %521 = vmatprep.subr.mxu0 0.0
        %522 = vmatpush1.msra.mxu0 0.0
        %523 = vmatprep.subr.mxu0 0.0
        %524 = vmatpush1.msra.mxu0 0.0
        %525 = vmatprep.subr.mxu0 0.0
        %526 = vmatpush1.msra.mxu0 0.0
        %527 = vmatprep.subr.mxu0 0.0
        %528 = vmatpush1.msra.mxu0 0.0
        %529 = vmatprep.subr.mxu0 0.0
        %530 = vmatpush1.msra.mxu0 0.0
        %531 = vmatprep.subr.mxu0 0.0
        %532 = vmatpush1.msra.mxu0 0.0
        %533 = vmatprep.subr.mxu0 0.0
        %534 = vmatpush1.msra.mxu0 0.0
        %535 = vmatprep.subr.mxu0 0.0
        %536 = vmatpush1.msra.mxu0 0.0
        %537 = vmatprep.subr.mxu0 0.0
        %538 = vmatpush1.msra.mxu0 0.0
        %539 = vmatprep.subr.mxu0 0.0
        %540 = vmatpush1.msra.mxu0 0.0
        %541 = vmatprep.subr.mxu0 0.0
        %542 = vmatpush1.msra.mxu0 0.0
        %543 = vmatprep.subr.mxu0 0.0
        %544 = vmatpush1.msra.mxu0 0.0
        %545 = vmatprep.subr.mxu0 0.0
        %546 = vmatpush1.msra.mxu0 0.0
        %547 = vmatprep.subr.mxu0 0.0
        %548 = vmatpush1.msra.mxu0 0.0
        %549 = vmatprep.subr.mxu0 0.0
        %550 = vmatpush1.msra.mxu0 0.0
        %551 = vmatprep.subr.mxu0 0.0
        %552 = vmatpush1.msra.mxu0 0.0
        %553 = vmatprep.subr.mxu0 0.0
        %554 = vmatpush1.msra.mxu0 0.0
        %555 = vmatprep.subr.mxu0 0.0
        %556 = vmatpush1.msra.mxu0 0.0
        %557 = vmatprep.mubr.f32.mxu0 0.0
        %558 = vmatmul.mubr.f32.gmra.mrb[0].mxu0 %v483
        %v559 = vpop.f32.mrb[0].mxu0
        %v560 = vadd.f32 %v441, %v559
        %v561 = vpop.f32.mrb[0].mxu0
        %v562 = vadd.f32 %v441, %v561
        %563 = vdwg.mxu0
        %564 = vmatprep.subr.mxu0 %v472
        %565 = vmatpush1.msra.mxu0 %v471
        %566 = vmatprep.subr.mxu0 %v491
        %567 = vmatpush1.msra.mxu0 %v489
        %568 = vmatprep.subr.mxu0 0.0
        %569 = vmatpush1.msra.mxu0 0.0
        %570 = vmatprep.subr.mxu0 0.0
        %571 = vmatpush1.msra.mxu0 0.0
        %572 = vmatprep.subr.mxu0 0.0
        %573 = vmatpush1.msra.mxu0 0.0
        %574 = vmatprep.subr.mxu0 0.0
        %575 = vmatpush1.msra.mxu0 0.0
        %576 = vmatprep.subr.mxu0 0.0
        %577 = vmatpush1.msra.mxu0 0.0
        %578 = vmatprep.subr.mxu0 0.0
        %579 = vmatpush1.msra.mxu0 0.0
        %580 = vmatprep.subr.mxu0 0.0
        %581 = vmatpush1.msra.mxu0 0.0
        %582 = vmatprep.subr.mxu0 0.0
        %583 = vmatpush1.msra.mxu0 0.0
        %584 = vmatprep.subr.mxu0 0.0
        %585 = vmatpush1.msra.mxu0 0.0
        %586 = vmatprep.subr.mxu0 0.0
        %587 = vmatpush1.msra.mxu0 0.0
        %588 = vmatprep.subr.mxu0 0.0
        %589 = vmatpush1.msra.mxu0 0.0
        %590 = vmatprep.subr.mxu0 0.0
        %591 = vmatpush1.msra.mxu0 0.0
        %592 = vmatprep.subr.mxu0 0.0
        %593 = vmatpush1.msra.mxu0 0.0
        %594 = vmatprep.subr.mxu0 0.0
        %595 = vmatpush1.msra.mxu0 0.0
        %596 = vmatprep.subr.mxu0 0.0
        %597 = vmatpush1.msra.mxu0 0.0
        %598 = vmatprep.subr.mxu0 0.0
        %599 = vmatpush1.msra.mxu0 0.0
        %600 = vmatprep.subr.mxu0 0.0
        %601 = vmatpush1.msra.mxu0 0.0
        %602 = vmatprep.subr.mxu0 0.0
        %603 = vmatpush1.msra.mxu0 0.0
        %604 = vmatprep.subr.mxu0 0.0
        %605 = vmatpush1.msra.mxu0 0.0
        %606 = vmatprep.subr.mxu0 0.0
        %607 = vmatpush1.msra.mxu0 0.0
        %608 = vmatprep.subr.mxu0 0.0
        %609 = vmatpush1.msra.mxu0 0.0
        %610 = vmatprep.subr.mxu0 0.0
        %611 = vmatpush1.msra.mxu0 0.0
        %612 = vmatprep.subr.mxu0 0.0
        %613 = vmatpush1.msra.mxu0 0.0
        %614 = vmatprep.subr.mxu0 0.0
        %615 = vmatpush1.msra.mxu0 0.0
        %616 = vmatprep.subr.mxu0 0.0
        %617 = vmatpush1.msra.mxu0 0.0
        %618 = vmatprep.subr.mxu0 0.0
        %619 = vmatpush1.msra.mxu0 0.0
        %620 = vmatprep.subr.mxu0 0.0
        %621 = vmatpush1.msra.mxu0 0.0
        %622 = vmatprep.subr.mxu0 0.0
        %623 = vmatpush1.msra.mxu0 0.0
        %624 = vmatprep.subr.mxu0 0.0
        %625 = vmatpush1.msra.mxu0 0.0
        %626 = vmatprep.subr.mxu0 0.0
        %627 = vmatpush1.msra.mxu0 0.0
        %628 = vmatprep.mubr.f32.mxu0 0.0
        %629 = vmatmul.mubr.f32.gmra.mrb[0].mxu0 %v483
        %v630 = vpop.f32.mrb[0].mxu0
        %v631 = vadd.f32 %v441, %v630
        %v632 = vpop.f32.mrb[0].mxu0
        %v633 = vadd.f32 %v441, %v632
        %634 = vdwg.mxu0
        %635 = vst [vmem:[%s361] sm:$0xff] %v560
        %636 = vst [vmem:[%s361 + $0x8] sm:$0xff] %v562
        %637 = vst [vmem:[%s361 + $0x10] sm:$0xff] %v631
        %638 = vst [vmem:[%s361 + $0x18] sm:$0xff] %v633
        %s639 = sand.u32 %s189, 1
        %s640 = scalar_lea.sflag [#allocation4], %s639
        %s641 = sand.u32 %s189, 1
        %s642 = smul.addr %s641, 32
        %s643 = scalar_lea.vmem [#allocation8], %s642
        // Predicated region
        $region53: #{tpu_custom_call.1} parent=39 // pred_check
          %p644 = pneg %p199
        $region54: #{tpu_custom_call.1} parent=39 // pred_check_branch
          %646 = sbr.rel (%p644) target = $region56
        $region55: #{tpu_custom_call.1} parent=39 // pred_region
          %s647 = smul.u32 4, %s30
          %s649 = ssub.s32 512, 512
          %650 = vsyncadd %s640, %s649
          %s651 = smul.addr %s29, 16
          %s652 = sadd.s32 %s647, %s651
          %s653 = smul.addr %s652, 128
          %s654 = scalar_lea.hbm %s5, %s653
          %s656 = sshll.u32 %s643, 4
          %s657 = int_to_ptr.vmem [resolvable:$true] %s656
          %659 = dma.vmem_to_hbm [thread:$0]  %s657, 512, %s654, %s640
        $region56: #{tpu_custom_call.1} parent=39 // pred_fallthru
          _
      $region40: #{tpu_custom_call.1} parent=5 // pred_fallthru
        _
      %p660 = scmp.le.s32.totalorder 2, %s20
      // Predicated region
      $region57: #{tpu_custom_call.1} parent=5 // pred_check
        %p661 = pneg %p660
      $region58: #{tpu_custom_call.1} parent=5 // pred_check_branch
        %663 = sbr.rel (%p661) target = $region60
      $region59: #{tpu_custom_call.1} parent=5 // pred_region
        %s664 = ssub.s32 %s20, 2
        // Predicated region
        $region61: #{tpu_custom_call.1} parent=59 // pred_check
          %p665 = pneg %p205
        $region62: #{tpu_custom_call.1} parent=59 // pred_check_branch
          %667 = sbr.rel (%p665) target = $region64
        $region63: #{tpu_custom_call.1} parent=59 // pred_region
          %s668 = sand.u32 %s190, 1
          %s669 = scalar_lea.sflag [#allocation4], %s668
          %s670 = sand.u32 %s190, 1
          %s671 = smul.addr %s670, 32
          %s672 = scalar_lea.vmem [#allocation8], %s671
          %673 = dma.done %s669, 512
        $region64: #{tpu_custom_call.1} parent=59 // pred_fallthru
          _
      $region60: #{tpu_custom_call.1} parent=5 // pred_fallthru
        _
    $region6: #{tpu_custom_call.1} parent=1 // loop_footer
      %s24 = sadd.s32 1, %s20
    $region7: #{tpu_custom_call.1} parent=1 // loop_footer_branch
      %19 = sbr.rel target = $region3
    $region8: #{tpu_custom_call.1} parent=1 // loop_exit
      _
    %674 = vsyncpa [#allocation3], 1
    %s675 = scalar_lea.sflag [#allocation3], 1
    %676 = vsyncpa %s675, 1
    %677 = vsyncpa [#allocation6], 1
    %s678 = scalar_lea.sflag [#allocation6], 1
    %679 = vsyncpa %s678, 1
    %680 = vsyncpa [#allocation4], 1
    %s681 = scalar_lea.sflag [#allocation4], 1
    %682 = vsyncpa %s681, 1

</llo_original>
